<compile_context>
chip_gen: v7x
topology: tpu7x:2x2x1
jax: 0.10.0
libtpu: 0.0.40
codegen_flags: <defaults>
</compile_context>

<pallas_src>
import math

import jax
import jax.numpy as jnp
import numpy as np
from jax import lax
from jax.experimental import pallas as pl
from jax.experimental.pallas import tpu as pltpu

_LANE = 128       # TPU lane width (last dim)
_SUBLANE = 8      # TPU sublane width (2nd-to-last dim)
_W_ITEMSIZE = 4   # prepared weights / bias are kept in float32


def _round_up(x, m):
    return ((x + m - 1) // m) * m


def _vmem_budgets():
    """(pipeline_budget, vmem_limit_bytes, default_block_n), generation-aware."""
    cap = None
    try:  # capability probe only; any failure falls back to v7x-safe budgets
        cap = pltpu.get_tpu_info().vmem_capacity_bytes
    except Exception:
        cap = None
    if cap is not None and cap >= 128 * 1024 * 1024:   # v5e / v6e: 128 MiB VMEM
        return 48 * 1024 * 1024, 64 * 1024 * 1024, 1024
    # v7x (64 MiB per TensorCore) or unknown: conservative, safe on every gen.
    return 20 * 1024 * 1024, 48 * 1024 * 1024, 512


# --------------------------------------------------------------------------- #
# Kernel
# --------------------------------------------------------------------------- #
def _sine_layer_kernel(x_ref, wt_ref, b_ref, o_ref):
    # MXU matmul with f32 accumulation; w0 is already folded into wt/b, so the
    # VPU only does the bias add and the sin.
    acc = jnp.dot(x_ref[...], wt_ref[...], preferred_element_type=jnp.float32)
    o_ref[...] = jnp.sin(acc + b_ref[...]).astype(o_ref.dtype)


# --------------------------------------------------------------------------- #
# Parameter init / one-time layout prep
# --------------------------------------------------------------------------- #
def init_sine_layer_params(key, in_dim, out_dim, w0, first_layer=False):
    """Matches SineLayer.__init__/init_weights. Returns PyTorch-layout params."""
    kw, kb = jax.random.split(key)
    if first_layer:
        bound_w = 1.0 / in_dim
    else:
        bound_w = math.sqrt(6.0 / in_dim) / w0
    weight = jax.random.uniform(kw, (out_dim, in_dim), jnp.float32,
                                minval=-bound_w, maxval=bound_w)
    bound_b = 1.0 / math.sqrt(in_dim)  # nn.Linear default bias init
    bias = jax.random.uniform(kb, (out_dim,), jnp.float32,
                              minval=-bound_b, maxval=bound_b)
    return weight, bias


def prepare_sine_layer_params(weight, bias, w0, in_dim_padded=None):
    """One-time layout prep (call at model-build time, reuse across forwards).

      * pre-transpose W to (in_dim, out_dim) and fold w0 into W and b
      * pad out_dim up to a lane multiple (128): lane-dense stores, full MXU cols
      * optionally zero-pad in_dim so the previous layer's *padded* activations
        can be fed directly (chained padded layout, no per-layer unpad slice)

    Returns (wt_p (in_dim_padded, out_dim_p) f32, b_p (1, out_dim_p) f32, out_dim).
    """
    out_dim, in_dim = weight.shape
    if in_dim_padded is None:
        in_dim_padded = in_dim
    assert in_dim_padded >= in_dim
    out_dim_p = _round_up(out_dim, _LANE)
    wt = (jnp.asarray(weight, jnp.float32) * float(w0)).T            # (in, out)
    wt_p = jnp.pad(wt, ((0, in_dim_padded - in_dim), (0, out_dim_p - out_dim)))
    b_p = jnp.pad(jnp.asarray(bias, jnp.float32) * float(w0),
                  (0, out_dim_p - out_dim))
    return wt_p, b_p.reshape(1, out_dim_p), out_dim


# --------------------------------------------------------------------------- #
# Tile selection
# --------------------------------------------------------------------------- #
def _choose_block_c(in_dim_p, out_dim_p, pipeline_budget):
    """Full-resident W if it fits half the budget; otherwise stream column tiles."""
    if (in_dim_p * out_dim_p + out_dim_p) * _W_ITEMSIZE <= pipeline_budget // 2:
        return out_dim_p
    max_c = (pipeline_budget // 4) // (2 * in_dim_p * _W_ITEMSIZE)
    return min(out_dim_p, max(_LANE, (max_c // _LANE) * _LANE))
    # TODO(synk): for extremely large in_dim where even a 128-wide W column tile
    # blows the budget, add a K-axis grid with an f32 VMEM accumulator.


def _choose_block_n(n_rows, in_dim_p, block_c, out_dim_p, x_item, out_item,
                    pipeline_budget, default_block_n):
    """Largest multiple-of-8 row tile that keeps pipeline buffers under budget."""
    if block_c == out_dim_p:
        fixed = (in_dim_p * out_dim_p + out_dim_p) * _W_ITEMSIZE      # resident x1
    else:
        fixed = 2 * (in_dim_p * block_c + block_c) * _W_ITEMSIZE      # streamed x2
    per_row = 2 * (in_dim_p * x_item + block_c * out_item)            # x + out, x2
    avail = max(pipeline_budget - fixed, per_row * _SUBLANE)
    cap = max(_SUBLANE, (avail // per_row) // _SUBLANE * _SUBLANE)
    block_n = min(default_block_n, cap, _round_up(n_rows, _SUBLANE))
    return max(_SUBLANE, (block_n // _SUBLANE) * _SUBLANE)


def _resident_spec(block_shape, index_map):
    """Single-buffered spec for an operand whose block index never changes."""
    if hasattr(pl, "Buffered"):
        try:
            return pl.BlockSpec(block_shape, index_map,
                                pipeline_mode=pl.Buffered(1))
        except TypeError:  # jax build without the pipeline_mode kwarg
            pass
    return pl.BlockSpec(block_shape, index_map)


# --------------------------------------------------------------------------- #
# Forward wrapper
# --------------------------------------------------------------------------- #
def sine_layer(x, wt_p, b_p, out_dim, *, block_n=None, block_c=None,
               slice_output=True):
    """sin(w0*(x@W^T+b)) with w0 pre-folded into (wt_p, b_p).

    x: (..., in_dim_padded). If slice_output, returns (..., out_dim); otherwise
    returns the padded (..., out_dim_p) layout (padded columns are exactly 0)
    for direct chaining into the next prepared layer.
    """
    in_dim_p, out_dim_p = wt_p.shape
    assert x.shape[-1] == in_dim_p, (x.shape, wt_p.shape)
    lead_shape = x.shape[:-1]
    x2 = x.reshape(-1, in_dim_p)
    n_rows = x2.shape[0]

    pipeline_budget, vmem_limit, default_block_n = _vmem_budgets()
    if block_c is None:
        block_c = _choose_block_c(in_dim_p, out_dim_p, pipeline_budget)
    assert block_c == out_dim_p or block_c % _LANE == 0
    if block_n is None:
        block_n = _choose_block_n(n_rows, in_dim_p, block_c, out_dim_p,
                                  x2.dtype.itemsize, x2.dtype.itemsize,
                                  pipeline_budget, default_block_n)
    assert block_n % _SUBLANE == 0, "block_n must be a multiple of 8"

    # cdiv grids: ragged final row/col blocks are masked by Pallas, so no
    # wrapper-side jnp.pad of x and no even-block rounding (both pure overhead).
    grid = (pl.cdiv(n_rows, block_n), pl.cdiv(out_dim_p, block_c))
    num_col_blocks = grid[1]

    def build(single_buffer_params):
        if single_buffer_params:
            wt_spec = _resident_spec((in_dim_p, block_c), lambda i, j: (0, j))
            b_spec = _resident_spec((1, block_c), lambda i, j: (0, j))
        else:
            wt_spec = pl.BlockSpec((in_dim_p, block_c), lambda i, j: (0, j))
            b_spec = pl.BlockSpec((1, block_c), lambda i, j: (0, j))
        return pl.pallas_call(
            _sine_layer_kernel,
            out_shape=jax.ShapeDtypeStruct((n_rows, out_dim_p), x.dtype),
            grid_spec=pltpu.PrefetchScalarGridSpec(
                num_scalar_prefetch=0,
                grid=grid,
                in_specs=[
                    pl.BlockSpec((block_n, in_dim_p), lambda i, j: (i, 0)),
                    wt_spec,
                    b_spec,
                ],
                out_specs=pl.BlockSpec((block_n, block_c), lambda i, j: (i, j)),
            ),
            compiler_params=pltpu.CompilerParams(
                dimension_semantics=("parallel", "arbitrary"),
                vmem_limit_bytes=vmem_limit),
        )

    if num_col_blocks == 1:
        # W/bias block index is constant across the grid -> keep them resident,
        # single-buffered. If Buffered(1) is rejected, fall back; any genuine,
        # unrelated error reproduces (and is raised) by the non-buffered build.
        try:
            out_p = build(True)(x2, wt_p, b_p)
        except (TypeError, ValueError, pltpu.LoweringException):
            out_p = build(False)(x2, wt_p, b_p)
    else:
        out_p = build(False)(x2, wt_p, b_p)

    if slice_output:
        return out_p[:, :out_dim].reshape(*lead_shape, out_dim)
    return out_p.reshape(*lead_shape, out_dim_p)


# --------------------------------------------------------------------------- #
# Demo / correctness checks
# --------------------------------------------------------------------------- #
if __name__ == "__main__":
    key = jax.random.PRNGKey(0)
    k_x, k_p1, k_p2, k_p3 = jax.random.split(key, 4)

    # Small SIREN: 8-d input -> 32 hidden -> 48 hidden -> 192 out, w0 = 30.
    B, N, IN_DIM, HID1, HID2, OUT3 = 4, 16, 8, 32, 48, 192
    W0 = 30.0

    x = jax.random.normal(k_x, (B, N, IN_DIM), jnp.float32)

    w1, b1 = init_sine_layer_params(k_p1, IN_DIM, HID1, W0, first_layer=True)
    w2, b2 = init_sine_layer_params(k_p2, HID1, HID2, W0, first_layer=False)
    w3, b3 = init_sine_layer_params(k_p3, HID2, OUT3, W0, first_layer=False)

    # Layer 1 prepared normally; layer 2 prepared with in_dim padded to layer 1's
    # lane-padded width so the two layers chain in the padded layout.
    wt1, bp1, d1 = prepare_sine_layer_params(w1, b1, W0)
    out_dim_p1 = wt1.shape[1]
    wt2, bp2, d2 = prepare_sine_layer_params(w2, b2, W0, in_dim_padded=out_dim_p1)
    wt3, bp3, d3 = prepare_sine_layer_params(w3, b3, W0)

    # Reference (PyTorch SineLayer semantics), high-precision matmuls.
    hp = lax.Precision.HIGHEST
    h_ref = jnp.sin((jnp.einsum("bni,oi->bno", x, w1, precision=hp) + b1) * W0)
    y_ref = jnp.sin((jnp.einsum("bni,oi->bno", h_ref, w2, precision=hp) + b2) * W0)
    z_ref = jnp.sin((jnp.einsum("bni,oi->bno", y_ref, w3, precision=hp) + b3) * W0)

    # 1) single layer, sliced output
    h = jax.block_until_ready(sine_layer(x, wt1, bp1, d1))
    np.testing.assert_allclose(np.asarray(h), np.asarray(h_ref),
                               rtol=2e-4, atol=2e-4)

    # 2) two layers chained in the padded layout; slice only at the end
    h_pad = sine_layer(x, wt1, bp1, d1, slice_output=False)
    y = jax.block_until_ready(sine_layer(h_pad, wt2, bp2, d2))
    np.testing.assert_allclose(np.asarray(y), np.asarray(y_ref),
                               rtol=2e-4, atol=2e-4)

    # 3) ragged multi-block row grid (64 rows, block_n=24 -> partial final block)
    h_ragged = jax.block_until_ready(sine_layer(x, wt1, bp1, d1, block_n=24))
    np.testing.assert_allclose(np.asarray(h_ragged), np.asarray(h_ref),
                               rtol=2e-4, atol=2e-4)

    # 4) column-tiled weight path (out_dim_p=256, block_c=128 -> 2 col blocks),
    #    the scaling path used when W is too big to stay resident in VMEM.
    z = jax.block_until_ready(sine_layer(y, wt3, bp3, d3, block_c=128))
    np.testing.assert_allclose(np.asarray(z), np.asarray(z_ref),
                               rtol=2e-4, atol=2e-4)

    print("KERNEL_OK")
</pallas_src>

<mosaic_0001>
module attributes {stable_mosaic.version = 11 : i64} {
  func.func @_sine_layer_kernel(%arg0: i32, %arg1: i32, %arg2: memref<64x8xf32, #tpu.memory_space<vmem>>, %arg3: memref<8x128xf32, #tpu.memory_space<vmem>>, %arg4: memref<1x128xf32, #tpu.memory_space<vmem>>, %arg5: memref<64x128xf32, #tpu.memory_space<vmem>>) attributes {dimension_semantics = [#tpu.dimension_semantics<parallel>, #tpu.dimension_semantics<arbitrary>], iteration_bounds = array<i64: 1, 1>, scalar_prefetch = 0 : i64, scratch_operands = 0 : i64, tpu.core_type = #tpu.core_type<tc>, window_params = [{transform_indices = @transform_0, window_bounds = array<i64: 64, 8>}, {pipeline_mode = #tpu.pipeline_mode<synchronous>, transform_indices = @transform_1, window_bounds = array<i64: 8, 128>}, {pipeline_mode = #tpu.pipeline_mode<synchronous>, transform_indices = @transform_2, window_bounds = array<i64: 1, 128>}, {transform_indices = @transform_3, window_bounds = array<i64: 64, 128>}]} {
    %c0 = arith.constant 0 : index
    %c0_0 = arith.constant 0 : index
    %0 = vector.load %arg2[%c0, %c0_0] : memref<64x8xf32, #tpu.memory_space<vmem>>, vector<64x8xf32>
    %c0_1 = arith.constant 0 : index
    %c0_2 = arith.constant 0 : index
    %1 = vector.load %arg3[%c0_1, %c0_2] : memref<8x128xf32, #tpu.memory_space<vmem>>, vector<8x128xf32>
    %cst = arith.constant dense<0.000000e+00> : vector<64x128xf32>
    %2 = tpu.matmul %0, %1, %cst {dimension_numbers = #tpu.dot_dimension_numbers<[1], [0], [0], [1], [0, 0, 1, 1], [], []>} : vector<64x8xf32>, vector<8x128xf32>, vector<64x128xf32> -> vector<64x128xf32>
    %c0_3 = arith.constant 0 : index
    %c0_4 = arith.constant 0 : index
    %3 = vector.load %arg4[%c0_3, %c0_4] : memref<1x128xf32, #tpu.memory_space<vmem>>, vector<1x128xf32>
    %4 = vector.broadcast %3 : vector<1x128xf32> to vector<64x128xf32>
    %5 = arith.addf %2, %4 : vector<64x128xf32>
    %6 = math.sin %5 : vector<64x128xf32>
    %c0_5 = arith.constant 0 : index
    %c0_6 = arith.constant 0 : index
    %7 = vector.load %arg5[%c0_5, %c0_6] : memref<64x128xf32, #tpu.memory_space<vmem>>, vector<64x128xf32>
    tpu.vector_store %arg5[%c0_5, %c0_6], %6 {strides = array<i32>} : memref<64x128xf32, #tpu.memory_space<vmem>>, vector<64x128xf32>,
    return
  }
  func.func @transform_0(%arg0: i32, %arg1: i32) -> (i32, i32) {
    %c0_i32 = arith.constant 0 : i32
    %c0_i32_0 = arith.constant 0 : i32
    return %arg0, %c0_i32 : i32, i32
  }
  func.func @transform_1(%arg0: i32, %arg1: i32) -> (i32, i32) {
    %c0_i32 = arith.constant 0 : i32
    %c0_i32_0 = arith.constant 0 : i32
    return %c0_i32, %arg1 : i32, i32
  }
  func.func @transform_2(%arg0: i32, %arg1: i32) -> (i32, i32) {
    %c0_i32 = arith.constant 0 : i32
    %c0_i32_0 = arith.constant 0 : i32
    return %c0_i32, %arg1 : i32, i32
  }
  func.func @transform_3(%arg0: i32, %arg1: i32) -> (i32, i32) {
    %c0_i32 = arith.constant 0 : i32
    return %arg0, %arg1 : i32, i32
  }
}

</mosaic_0001>

<llo_original>
// kernel: tpu_custom_call.1
$region0: #{tpu_custom_call.1}
  #allocation0 [shape = 'u32[]', space=smem, size = 0x4, offset = 0x4, fixed_abs, tag = 'smem constant byte address 0x4 - core index']
  #allocation1 [shape = 'u32[144,128]{1,0:T(1,128)}', space=vmem, size = 0x12000, scoped, tag = 'internal scratch']
  %s0 = inlined_call_operand.vmem [shape: f32[64,8], index: 0, kind: input, shape index: {}]
  %s1 = inlined_call_operand.vmem [shape: f32[8,128], index: 1, kind: input, shape index: {}]
  %s2 = inlined_call_operand.vmem [shape: f32[1,128], index: 2, kind: input, shape index: {}]
  %s3 = inlined_call_operand.hbm [shape: f32[64,128], index: 3, kind: output, shape index: {}]
  %s4 = sld [smem:[#allocation0]]
  $region22: #{tpu_custom_call.1} parent=0
    _
  %s6 = ssub.s32 1, %s4
  %s7 = scalar_select 0, %s6, %s4
  $region1: #{tpu_custom_call.1} parent=0
    #allocation2 [shape = 'u8[32768]{0}', space=vmem, size = 0x8000, scoped, tag = 'output window, operand 0, single buffered']
    #allocation3 [shape = 's32[1]{0}', space=sflag, size = 0x4, scoped, tag = 'scoped memory for tpu_custom_call.1']
    %8 = vsyncpa [#allocation3], 0
    // Predicated region
    $region2: #{tpu_custom_call.1} parent=1 // pred_check
      _
    $region3: #{tpu_custom_call.1} parent=1 // pred_check_branch
      %10 = sbr.rel (0) target = $region5
    $region4: #{tpu_custom_call.1} parent=1 // pred_region
      _
    $region5: #{tpu_custom_call.1} parent=1 // pred_fallthru
      _
    // Predicated region
    $region6: #{tpu_custom_call.1} parent=1 // pred_check
      _
    $region7: #{tpu_custom_call.1} parent=1 // pred_check_branch
      %12 = sbr.rel (0) target = $region9
    $region8: #{tpu_custom_call.1} parent=1 // pred_region
      _
    $region9: #{tpu_custom_call.1} parent=1 // pred_fallthru
      _
    // Predicated region
    $region10: #{tpu_custom_call.1} parent=1 // pred_check
      _
    $region11: #{tpu_custom_call.1} parent=1 // pred_check_branch
      %14 = sbr.rel (0) target = $region13
    $region12: #{tpu_custom_call.1} parent=1 // pred_region
      _
    $region13: #{tpu_custom_call.1} parent=1 // pred_fallthru
      _
    %v15 = vld [vmem:[%s0] sm:$0xff]
    %v16 = vld [vmem:[%s0 + $0x8] sm:$0xff]
    %v17 = vld [vmem:[%s0 + $0x10] sm:$0xff]
    %v18 = vld [vmem:[%s0 + $0x18] sm:$0xff]
    %v19 = vld [vmem:[%s0 + $0x20] sm:$0xff]
    %v20 = vld [vmem:[%s0 + $0x28] sm:$0xff]
    %v21 = vld [vmem:[%s0 + $0x30] sm:$0xff]
    %v22 = vld [vmem:[%s0 + $0x38] sm:$0xff]
    %v23 = vld [vmem:[%s1] sm:$0xff]
    %v24 = vld [vmem:[%s2] sm:$0x1]
    %v26 = vlaneseq
    %v27 = vshrl.u32 %v26, 7
    %v28 = vsub.s32 0, %v27
    %v29 = vrot.slane %v24, %v28
    %vm31 = vcmask 64512
    %v33 = vsel %vm31, %v15, 0
    %v36 = vsel %vm31, %v16, 0
    %v39 = vsel %vm31, %v17, 0
    %v42 = vsel %vm31, %v18, 0
    %v45 = vsel %vm31, %v19, 0
    %v48 = vsel %vm31, %v20, 0
    %v51 = vsel %vm31, %v21, 0
    %v54 = vsel %vm31, %v22, 0
    %56 = vmatprep.subr.mxu0 0.0
    %57 = vmatpush1.msra.mxu0 %v23
    %58 = vmatprep.subr.mxu0 0.0
    %59 = vmatpush1.msra.mxu0 0.0
    %60 = vmatprep.subr.mxu0 0.0
    %61 = vmatpush1.msra.mxu0 0.0
    %62 = vmatprep.subr.mxu0 0.0
    %63 = vmatpush1.msra.mxu0 0.0
    %64 = vmatprep.subr.mxu0 0.0
    %65 = vmatpush1.msra.mxu0 0.0
    %66 = vmatprep.subr.mxu0 0.0
    %67 = vmatpush1.msra.mxu0 0.0
    %68 = vmatprep.subr.mxu0 0.0
    %69 = vmatpush1.msra.mxu0 0.0
    %70 = vmatprep.subr.mxu0 0.0
    %71 = vmatpush1.msra.mxu0 0.0
    %72 = vmatprep.subr.mxu0 0.0
    %73 = vmatpush1.msra.mxu0 0.0
    %74 = vmatprep.subr.mxu0 0.0
    %75 = vmatpush1.msra.mxu0 0.0
    %76 = vmatprep.subr.mxu0 0.0
    %77 = vmatpush1.msra.mxu0 0.0
    %78 = vmatprep.subr.mxu0 0.0
    %79 = vmatpush1.msra.mxu0 0.0
    %80 = vmatprep.subr.mxu0 0.0
    %81 = vmatpush1.msra.mxu0 0.0
    %82 = vmatprep.subr.mxu0 0.0
    %83 = vmatpush1.msra.mxu0 0.0
    %84 = vmatprep.subr.mxu0 0.0
    %85 = vmatpush1.msra.mxu0 0.0
    %86 = vmatprep.subr.mxu0 0.0
    %87 = vmatpush1.msra.mxu0 0.0
    %88 = vmatprep.subr.mxu0 0.0
    %89 = vmatpush1.msra.mxu0 0.0
    %90 = vmatprep.subr.mxu0 0.0
    %91 = vmatpush1.msra.mxu0 0.0
    %92 = vmatprep.subr.mxu0 0.0
    %93 = vmatpush1.msra.mxu0 0.0
    %94 = vmatprep.subr.mxu0 0.0
    %95 = vmatpush1.msra.mxu0 0.0
    %96 = vmatprep.subr.mxu0 0.0
    %97 = vmatpush1.msra.mxu0 0.0
    %98 = vmatprep.subr.mxu0 0.0
    %99 = vmatpush1.msra.mxu0 0.0
    %100 = vmatprep.subr.mxu0 0.0
    %101 = vmatpush1.msra.mxu0 0.0
    %102 = vmatprep.subr.mxu0 0.0
    %103 = vmatpush1.msra.mxu0 0.0
    %104 = vmatprep.subr.mxu0 0.0
    %105 = vmatpush1.msra.mxu0 0.0
    %106 = vmatprep.subr.mxu0 0.0
    %107 = vmatpush1.msra.mxu0 0.0
    %108 = vmatprep.subr.mxu0 0.0
    %109 = vmatpush1.msra.mxu0 0.0
    %110 = vmatprep.subr.mxu0 0.0
    %111 = vmatpush1.msra.mxu0 0.0
    %112 = vmatprep.subr.mxu0 0.0
    %113 = vmatpush1.msra.mxu0 0.0
    %114 = vmatprep.subr.mxu0 0.0
    %115 = vmatpush1.msra.mxu0 0.0
    %116 = vmatprep.subr.mxu0 0.0
    %117 = vmatpush1.msra.mxu0 0.0
    %118 = vmatprep.subr.mxu0 0.0
    %119 = vmatpush1.msra.mxu0 0.0
    %120 = vmatprep.mubr.f32.mxu0 0.0
    %121 = vmatmul.mubr.f32.gmra.mrb[0].mxu0 %v33
    %v122 = vpop.f32.mrb[0].mxu0
    %v123 = vadd.f32 %v29, %v122
    %v124 = vpop.f32.mrb[0].mxu0
    %125 = vmatprep.mubr.f32.mxu0 0.0
    %126 = vmatmul.mubr.f32.gmra.mrb[0].mxu0 %v36
    %v127 = vpop.f32.mrb[0].mxu0
    %v128 = vadd.f32 %v29, %v127
    %v129 = vpop.f32.mrb[0].mxu0
    %130 = vmatprep.mubr.f32.mxu0 0.0
    %131 = vmatmul.mubr.f32.gmra.mrb[0].mxu0 %v39
    %v132 = vpop.f32.mrb[0].mxu0
    %v133 = vadd.f32 %v29, %v132
    %v134 = vpop.f32.mrb[0].mxu0
    %135 = vmatprep.mubr.f32.mxu0 0.0
    %136 = vmatmul.mubr.f32.gmra.mrb[0].mxu0 %v42
    %v137 = vpop.f32.mrb[0].mxu0
    %v138 = vadd.f32 %v29, %v137
    %v139 = vpop.f32.mrb[0].mxu0
    %140 = vmatprep.mubr.f32.mxu0 0.0
    %141 = vmatmul.mubr.f32.gmra.mrb[0].mxu0 %v45
    %v142 = vpop.f32.mrb[0].mxu0
    %v143 = vadd.f32 %v29, %v142
    %v144 = vpop.f32.mrb[0].mxu0
    %145 = vmatprep.mubr.f32.mxu0 0.0
    %146 = vmatmul.mubr.f32.gmra.mrb[0].mxu0 %v48
    %v147 = vpop.f32.mrb[0].mxu0
    %v148 = vadd.f32 %v29, %v147
    %v149 = vpop.f32.mrb[0].mxu0
    %150 = vmatprep.mubr.f32.mxu0 0.0
    %151 = vmatmul.mubr.f32.gmra.mrb[0].mxu0 %v51
    %v152 = vpop.f32.mrb[0].mxu0
    %v153 = vadd.f32 %v29, %v152
    %v154 = vpop.f32.mrb[0].mxu0
    %155 = vmatprep.mubr.f32.mxu0 0.0
    %156 = vmatmul.mubr.f32.gmra.mrb[0].mxu0 %v54
    %v157 = vpop.f32.mrb[0].mxu0
    %v158 = vadd.f32 %v29, %v157
    %v159 = vpop.f32.mrb[0].mxu0
    %160 = vdwg.mxu0
    %v161 = vand.u32 2147483647, %v123
    %vm162 = vcmp.le.f32.partialorder %v161, 0.7853982
    %vm163 = vcmp.lt.s32.totalorder %v123, 0
    %v164 = vand.u32 %v123, 2139095040
    %v165 = vshrl.u32 %v164, 23
    %v166 = vsub.s32 %v165, 127
    %v167 = vand.u32 2147483647, %v123
    %v168 = vand.u32 %v167, 8388607
    %v169 = vor.u32 %v168, 8388608
    %v170 = vsub.s32 0, %v169
    %v171 = vadd.s32 %v166, 1
    %vm172 = vcmp.gt.s32.totalorder %v171, 0
    %v173 = vsel %vm172, %v171, 0
    %v174 = vshrl.u32 %v173, 5
    %v175 = vand.u32 %v173, 31
    %v176 = vsub.s32 32, %v175
    %v177 = vshrl.u32 683565275, %v176
    %v178 = vshll.u32 683565275, %v175
    %v179 = vshrl.u32 2475754826, %v176
    %v180 = vor.u32 %v178, %v179
    %v181 = vshll.u32 2475754826, %v175
    %v182 = vshrl.u32 2131351028, %v176
    %v183 = vor.u32 %v181, %v182
    %v184 = vshll.u32 2131351028, %v175
    %v185 = vshrl.u32 2102212464, %v176
    %v186 = vor.u32 %v184, %v185
    %v187 = vshll.u32 2102212464, %v175
    %v188 = vshrl.u32 920167782, %v176
    %v189 = vor.u32 %v187, %v188
    %v190 = vshll.u32 920167782, %v175
    %v191 = vshrl.u32 1326507024, %v176
    %v192 = vor.u32 %v190, %v191
    %vm193 = vcmp.lt.s32.totalorder %v174, 1
    %vm194 = vcmp.lt.s32.totalorder %v174, 2
    %vm195 = vcmp.lt.s32.totalorder %v174, 3
    %vm196 = vcmp.lt.s32.totalorder %v174, 4
    %v197 = vsel %vm193, %v177, %v180
    %v198 = vsel %vm196, %v186, 2102212464
    %v199 = vsel %vm195, %v183, %v198
    %v200 = vsel %vm194, %v197, %v199
    %v201 = vsel %vm193, %v180, %v183
    %v202 = vsel %vm196, %v189, 920167782
    %v203 = vsel %vm195, %v186, %v202
    %v204 = vsel %vm194, %v201, %v203
    %v205 = vsel %vm193, %v183, %v186
    %v206 = vsel %vm196, %v192, 1326507024
    %v207 = vsel %vm195, %v189, %v206
    %v208 = vsel %vm194, %v205, %v207
    %v209 = vshll.u32 %v169, 8
    %v210 = vmul.u32.u64.compose %v209, %v208
    %v211 = vextract.low.u32 %v210
    %v212 = vextract.high.u32 %v210
    %v213 = vmul.u32.u64.compose %v209, %v204
    %v214 = vextract.low.u32 %v213
    %v215 = vextract.high.u32 %v213
    %v216 = vmul.u32 %v209, %v200
    %v217 = vadd.s32 %v212, %v214
    %vm218 = vc.u32 %v212, %v214
    %v219 = vadd.s32 %v215, 1
    %v220 = vsel %vm218, %v219, %v215
    %v221 = vadd.s32 %v216, %v220
    %v222 = vadd.s32 %v221, 536870912
    %v223 = vshrl.u32 %v222, 30
    %v224 = vshll.u32 %v223, 30
    %v225 = vsub.s32 %v221, %v224
    %vm226 = vcmp.lt.s32.totalorder %v225, 0
    %v227 = vsub.s32 0, %v225
    %v228 = vsel %vm226, %v227, %v225
    %v229 = vclz %v228
    %v230 = vsub.s32 %v229, 2
    %vm231 = vcmp.gt.s32.totalorder 0, %v230
    %v232 = vsel %vm231, 0, %v230
    %v233 = vsub.s32 32, %v232
    %v234 = vshll.u32 %v225, %v232
    %v235 = vshrl.u32 %v217, %v233
    %v236 = vor.u32 %v234, %v235
    %v237 = vsub.s32 4294967266, %v232
    %v238 = vadd.s32 %v237, 127
    %v239 = vshll.u32 %v238, 23
    %v240 = vor.u32 4788187, %v239
    %v241 = vand.u32 2147483647, %v240
    %v243 = vcvt.s32.f32 %v236
    %v244 = vmul.f32 %v243, %v241
    %v245 = vxor.u32 %v244, 2147483648
    %v246 = vsel %vm163, %v245, %v244
    %v247 = vsub.s32 4, %v223
    %v248 = vsel %vm163, %v247, %v223
    %v249 = vsel %vm162, %v123, %v246
    %v250 = vsel %vm162, 0, %v248
    %v251 = vcosq.f32.pop %v249
    %v252 = vsinq.f32.pop %v249
    %vm253 = vweird.f32 %v123
    %v254 = vadd.s32 %v250, 3
    %v255 = vand.u32 %v254, 3
    %vm256 = vcmp.lt.s32.totalorder %v255, 2
    %vm257 = vcmp.eq.s32.totalorder %v255, 0
    %v258 = vxor.u32 %v252, 2147483648
    %v259 = vsel %vm257, %v251, %v258
    %vm260 = vcmp.eq.s32.totalorder %v255, 2
    %v261 = vxor.u32 %v251, 2147483648
    %v262 = vsel %vm260, %v261, %v252
    %v263 = vsel %vm256, %v259, %v262
    %v264 = vsel %vm253, nan, %v263
    %v265 = vand.u32 2147483647, %v128
    %vm266 = vcmp.le.f32.partialorder %v265, 0.7853982
    %vm267 = vcmp.lt.s32.totalorder %v128, 0
    %v268 = vand.u32 %v128, 2139095040
    %v269 = vshrl.u32 %v268, 23
    %v270 = vsub.s32 %v269, 127
    %v271 = vand.u32 2147483647, %v128
    %v272 = vand.u32 %v271, 8388607
    %v273 = vor.u32 %v272, 8388608
    %v274 = vsub.s32 0, %v273
    %v275 = vadd.s32 %v270, 1
    %vm276 = vcmp.gt.s32.totalorder %v275, 0
    %v277 = vsel %vm276, %v275, 0
    %v278 = vshrl.u32 %v277, 5
    %v279 = vand.u32 %v277, 31
    %v280 = vsub.s32 32, %v279
    %v281 = vshrl.u32 683565275, %v280
    %v282 = vshll.u32 683565275, %v279
    %v283 = vshrl.u32 2475754826, %v280
    %v284 = vor.u32 %v282, %v283
    %v285 = vshll.u32 2475754826, %v279
    %v286 = vshrl.u32 2131351028, %v280
    %v287 = vor.u32 %v285, %v286
    %v288 = vshll.u32 2131351028, %v279
    %v289 = vshrl.u32 2102212464, %v280
    %v290 = vor.u32 %v288, %v289
    %v291 = vshll.u32 2102212464, %v279
    %v292 = vshrl.u32 920167782, %v280
    %v293 = vor.u32 %v291, %v292
    %v294 = vshll.u32 920167782, %v279
    %v295 = vshrl.u32 1326507024, %v280
    %v296 = vor.u32 %v294, %v295
    %vm297 = vcmp.lt.s32.totalorder %v278, 1
    %vm298 = vcmp.lt.s32.totalorder %v278, 2
    %vm299 = vcmp.lt.s32.totalorder %v278, 3
    %vm300 = vcmp.lt.s32.totalorder %v278, 4
    %v301 = vsel %vm297, %v281, %v284
    %v302 = vsel %vm300, %v290, 2102212464
    %v303 = vsel %vm299, %v287, %v302
    %v304 = vsel %vm298, %v301, %v303
    %v305 = vsel %vm297, %v284, %v287
    %v306 = vsel %vm300, %v293, 920167782
    %v307 = vsel %vm299, %v290, %v306
    %v308 = vsel %vm298, %v305, %v307
    %v309 = vsel %vm297, %v287, %v290
    %v310 = vsel %vm300, %v296, 1326507024
    %v311 = vsel %vm299, %v293, %v310
    %v312 = vsel %vm298, %v309, %v311
    %v313 = vshll.u32 %v273, 8
    %v314 = vmul.u32.u64.compose %v313, %v312
    %v315 = vextract.low.u32 %v314
    %v316 = vextract.high.u32 %v314
    %v317 = vmul.u32.u64.compose %v313, %v308
    %v318 = vextract.low.u32 %v317
    %v319 = vextract.high.u32 %v317
    %v320 = vmul.u32 %v313, %v304
    %v321 = vadd.s32 %v316, %v318
    %vm322 = vc.u32 %v316, %v318
    %v323 = vadd.s32 %v319, 1
    %v324 = vsel %vm322, %v323, %v319
    %v325 = vadd.s32 %v320, %v324
    %v326 = vadd.s32 %v325, 536870912
    %v327 = vshrl.u32 %v326, 30
    %v328 = vshll.u32 %v327, 30
    %v329 = vsub.s32 %v325, %v328
    %vm330 = vcmp.lt.s32.totalorder %v329, 0
    %v331 = vsub.s32 0, %v329
    %v332 = vsel %vm330, %v331, %v329
    %v333 = vclz %v332
    %v334 = vsub.s32 %v333, 2
    %vm335 = vcmp.gt.s32.totalorder 0, %v334
    %v336 = vsel %vm335, 0, %v334
    %v337 = vsub.s32 32, %v336
    %v338 = vshll.u32 %v329, %v336
    %v339 = vshrl.u32 %v321, %v337
    %v340 = vor.u32 %v338, %v339
    %v341 = vsub.s32 4294967266, %v336
    %v342 = vadd.s32 %v341, 127
    %v343 = vshll.u32 %v342, 23
    %v344 = vor.u32 4788187, %v343
    %v345 = vand.u32 2147483647, %v344
    %v347 = vcvt.s32.f32 %v340
    %v348 = vmul.f32 %v347, %v345
    %v349 = vxor.u32 %v348, 2147483648
    %v350 = vsel %vm267, %v349, %v348
    %v351 = vsub.s32 4, %v327
    %v352 = vsel %vm267, %v351, %v327
    %v353 = vsel %vm266, %v128, %v350
    %v354 = vsel %vm266, 0, %v352
    %v355 = vcosq.f32.pop %v353
    %v356 = vsinq.f32.pop %v353
    %vm357 = vweird.f32 %v128
    %v358 = vadd.s32 %v354, 3
    %v359 = vand.u32 %v358, 3
    %vm360 = vcmp.lt.s32.totalorder %v359, 2
    %vm361 = vcmp.eq.s32.totalorder %v359, 0
    %v362 = vxor.u32 %v356, 2147483648
    %v363 = vsel %vm361, %v355, %v362
    %vm364 = vcmp.eq.s32.totalorder %v359, 2
    %v365 = vxor.u32 %v355, 2147483648
    %v366 = vsel %vm364, %v365, %v356
    %v367 = vsel %vm360, %v363, %v366
    %v368 = vsel %vm357, nan, %v367
    %v369 = vand.u32 2147483647, %v133
    %vm370 = vcmp.le.f32.partialorder %v369, 0.7853982
    %vm371 = vcmp.lt.s32.totalorder %v133, 0
    %v372 = vand.u32 %v133, 2139095040
    %v373 = vshrl.u32 %v372, 23
    %v374 = vsub.s32 %v373, 127
    %v375 = vand.u32 2147483647, %v133
    %v376 = vand.u32 %v375, 8388607
    %v377 = vor.u32 %v376, 8388608
    %v378 = vsub.s32 0, %v377
    %v379 = vadd.s32 %v374, 1
    %vm380 = vcmp.gt.s32.totalorder %v379, 0
    %v381 = vsel %vm380, %v379, 0
    %v382 = vshrl.u32 %v381, 5
    %v383 = vand.u32 %v381, 31
    %v384 = vsub.s32 32, %v383
    %v385 = vshrl.u32 683565275, %v384
    %v386 = vshll.u32 683565275, %v383
    %v387 = vshrl.u32 2475754826, %v384
    %v388 = vor.u32 %v386, %v387
    %v389 = vshll.u32 2475754826, %v383
    %v390 = vshrl.u32 2131351028, %v384
    %v391 = vor.u32 %v389, %v390
    %v392 = vshll.u32 2131351028, %v383
    %v393 = vshrl.u32 2102212464, %v384
    %v394 = vor.u32 %v392, %v393
    %v395 = vshll.u32 2102212464, %v383
    %v396 = vshrl.u32 920167782, %v384
    %v397 = vor.u32 %v395, %v396
    %v398 = vshll.u32 920167782, %v383
    %v399 = vshrl.u32 1326507024, %v384
    %v400 = vor.u32 %v398, %v399
    %vm401 = vcmp.lt.s32.totalorder %v382, 1
    %vm402 = vcmp.lt.s32.totalorder %v382, 2
    %vm403 = vcmp.lt.s32.totalorder %v382, 3
    %vm404 = vcmp.lt.s32.totalorder %v382, 4
    %v405 = vsel %vm401, %v385, %v388
    %v406 = vsel %vm404, %v394, 2102212464
    %v407 = vsel %vm403, %v391, %v406
    %v408 = vsel %vm402, %v405, %v407
    %v409 = vsel %vm401, %v388, %v391
    %v410 = vsel %vm404, %v397, 920167782
    %v411 = vsel %vm403, %v394, %v410
    %v412 = vsel %vm402, %v409, %v411
    %v413 = vsel %vm401, %v391, %v394
    %v414 = vsel %vm404, %v400, 1326507024
    %v415 = vsel %vm403, %v397, %v414
    %v416 = vsel %vm402, %v413, %v415
    %v417 = vshll.u32 %v377, 8
    %v418 = vmul.u32.u64.compose %v417, %v416
    %v419 = vextract.low.u32 %v418
    %v420 = vextract.high.u32 %v418
    %v421 = vmul.u32.u64.compose %v417, %v412
    %v422 = vextract.low.u32 %v421
    %v423 = vextract.high.u32 %v421
    %v424 = vmul.u32 %v417, %v408
    %v425 = vadd.s32 %v420, %v422
    %vm426 = vc.u32 %v420, %v422
    %v427 = vadd.s32 %v423, 1
    %v428 = vsel %vm426, %v427, %v423
    %v429 = vadd.s32 %v424, %v428
    %v430 = vadd.s32 %v429, 536870912
    %v431 = vshrl.u32 %v430, 30
    %v432 = vshll.u32 %v431, 30
    %v433 = vsub.s32 %v429, %v432
    %vm434 = vcmp.lt.s32.totalorder %v433, 0
    %v435 = vsub.s32 0, %v433
    %v436 = vsel %vm434, %v435, %v433
    %v437 = vclz %v436
    %v438 = vsub.s32 %v437, 2
    %vm439 = vcmp.gt.s32.totalorder 0, %v438
    %v440 = vsel %vm439, 0, %v438
    %v441 = vsub.s32 32, %v440
    %v442 = vshll.u32 %v433, %v440
    %v443 = vshrl.u32 %v425, %v441
    %v444 = vor.u32 %v442, %v443
    %v445 = vsub.s32 4294967266, %v440
    %v446 = vadd.s32 %v445, 127
    %v447 = vshll.u32 %v446, 23
    %v448 = vor.u32 4788187, %v447
    %v449 = vand.u32 2147483647, %v448
    %v451 = vcvt.s32.f32 %v444
    %v452 = vmul.f32 %v451, %v449
    %v453 = vxor.u32 %v452, 2147483648
    %v454 = vsel %vm371, %v453, %v452
    %v455 = vsub.s32 4, %v431
    %v456 = vsel %vm371, %v455, %v431
    %v457 = vsel %vm370, %v133, %v454
    %v458 = vsel %vm370, 0, %v456
    %v459 = vcosq.f32.pop %v457
    %v460 = vsinq.f32.pop %v457
    %vm461 = vweird.f32 %v133
    %v462 = vadd.s32 %v458, 3
    %v463 = vand.u32 %v462, 3
    %vm464 = vcmp.lt.s32.totalorder %v463, 2
    %vm465 = vcmp.eq.s32.totalorder %v463, 0
    %v466 = vxor.u32 %v460, 2147483648
    %v467 = vsel %vm465, %v459, %v466
    %vm468 = vcmp.eq.s32.totalorder %v463, 2
    %v469 = vxor.u32 %v459, 2147483648
    %v470 = vsel %vm468, %v469, %v460
    %v471 = vsel %vm464, %v467, %v470
    %v472 = vsel %vm461, nan, %v471
    %v473 = vand.u32 2147483647, %v138
    %vm474 = vcmp.le.f32.partialorder %v473, 0.7853982
    %vm475 = vcmp.lt.s32.totalorder %v138, 0
    %v476 = vand.u32 %v138, 2139095040
    %v477 = vshrl.u32 %v476, 23
    %v478 = vsub.s32 %v477, 127
    %v479 = vand.u32 2147483647, %v138
    %v480 = vand.u32 %v479, 8388607
    %v481 = vor.u32 %v480, 8388608
    %v482 = vsub.s32 0, %v481
    %v483 = vadd.s32 %v478, 1
    %vm484 = vcmp.gt.s32.totalorder %v483, 0
    %v485 = vsel %vm484, %v483, 0
    %v486 = vshrl.u32 %v485, 5
    %v487 = vand.u32 %v485, 31
    %v488 = vsub.s32 32, %v487
    %v489 = vshrl.u32 683565275, %v488
    %v490 = vshll.u32 683565275, %v487
    %v491 = vshrl.u32 2475754826, %v488
    %v492 = vor.u32 %v490, %v491
    %v493 = vshll.u32 2475754826, %v487
    %v494 = vshrl.u32 2131351028, %v488
    %v495 = vor.u32 %v493, %v494
    %v496 = vshll.u32 2131351028, %v487
    %v497 = vshrl.u32 2102212464, %v488
    %v498 = vor.u32 %v496, %v497
    %v499 = vshll.u32 2102212464, %v487
    %v500 = vshrl.u32 920167782, %v488
    %v501 = vor.u32 %v499, %v500
    %v502 = vshll.u32 920167782, %v487
    %v503 = vshrl.u32 1326507024, %v488
    %v504 = vor.u32 %v502, %v503
    %vm505 = vcmp.lt.s32.totalorder %v486, 1
    %vm506 = vcmp.lt.s32.totalorder %v486, 2
    %vm507 = vcmp.lt.s32.totalorder %v486, 3
    %vm508 = vcmp.lt.s32.totalorder %v486, 4
    %v509 = vsel %vm505, %v489, %v492
    %v510 = vsel %vm508, %v498, 2102212464
    %v511 = vsel %vm507, %v495, %v510
    %v512 = vsel %vm506, %v509, %v511
    %v513 = vsel %vm505, %v492, %v495
    %v514 = vsel %vm508, %v501, 920167782
    %v515 = vsel %vm507, %v498, %v514
    %v516 = vsel %vm506, %v513, %v515
    %v517 = vsel %vm505, %v495, %v498
    %v518 = vsel %vm508, %v504, 1326507024
    %v519 = vsel %vm507, %v501, %v518
    %v520 = vsel %vm506, %v517, %v519
    %v521 = vshll.u32 %v481, 8
    %v522 = vmul.u32.u64.compose %v521, %v520
    %v523 = vextract.low.u32 %v522
    %v524 = vextract.high.u32 %v522
    %v525 = vmul.u32.u64.compose %v521, %v516
    %v526 = vextract.low.u32 %v525
    %v527 = vextract.high.u32 %v525
    %v528 = vmul.u32 %v521, %v512
    %v529 = vadd.s32 %v524, %v526
    %vm530 = vc.u32 %v524, %v526
    %v531 = vadd.s32 %v527, 1
    %v532 = vsel %vm530, %v531, %v527
    %v533 = vadd.s32 %v528, %v532
    %v534 = vadd.s32 %v533, 536870912
    %v535 = vshrl.u32 %v534, 30
    %v536 = vshll.u32 %v535, 30
    %v537 = vsub.s32 %v533, %v536
    %vm538 = vcmp.lt.s32.totalorder %v537, 0
    %v539 = vsub.s32 0, %v537
    %v540 = vsel %vm538, %v539, %v537
    %v541 = vclz %v540
    %v542 = vsub.s32 %v541, 2
    %vm543 = vcmp.gt.s32.totalorder 0, %v542
    %v544 = vsel %vm543, 0, %v542
    %v545 = vsub.s32 32, %v544
    %v546 = vshll.u32 %v537, %v544
    %v547 = vshrl.u32 %v529, %v545
    %v548 = vor.u32 %v546, %v547
    %v549 = vsub.s32 4294967266, %v544
    %v550 = vadd.s32 %v549, 127
    %v551 = vshll.u32 %v550, 23
    %v552 = vor.u32 4788187, %v551
    %v553 = vand.u32 2147483647, %v552
    %v555 = vcvt.s32.f32 %v548
    %v556 = vmul.f32 %v555, %v553
    %v557 = vxor.u32 %v556, 2147483648
    %v558 = vsel %vm475, %v557, %v556
    %v559 = vsub.s32 4, %v535
    %v560 = vsel %vm475, %v559, %v535
    %v561 = vsel %vm474, %v138, %v558
    %v562 = vsel %vm474, 0, %v560
    %v563 = vcosq.f32.pop %v561
    %v564 = vsinq.f32.pop %v561
    %vm565 = vweird.f32 %v138
    %v566 = vadd.s32 %v562, 3
    %v567 = vand.u32 %v566, 3
    %vm568 = vcmp.lt.s32.totalorder %v567, 2
    %vm569 = vcmp.eq.s32.totalorder %v567, 0
    %v570 = vxor.u32 %v564, 2147483648
    %v571 = vsel %vm569, %v563, %v570
    %vm572 = vcmp.eq.s32.totalorder %v567, 2
    %v573 = vxor.u32 %v563, 2147483648
    %v574 = vsel %vm572, %v573, %v564
    %v575 = vsel %vm568, %v571, %v574
    %v576 = vsel %vm565, nan, %v575
    %v577 = vand.u32 2147483647, %v143
    %vm578 = vcmp.le.f32.partialorder %v577, 0.7853982
    %vm579 = vcmp.lt.s32.totalorder %v143, 0
    %v580 = vand.u32 %v143, 2139095040
    %v581 = vshrl.u32 %v580, 23
    %v582 = vsub.s32 %v581, 127
    %v583 = vand.u32 2147483647, %v143
    %v584 = vand.u32 %v583, 8388607
    %v585 = vor.u32 %v584, 8388608
    %v586 = vsub.s32 0, %v585
    %v587 = vadd.s32 %v582, 1
    %vm588 = vcmp.gt.s32.totalorder %v587, 0
    %v589 = vsel %vm588, %v587, 0
    %v590 = vshrl.u32 %v589, 5
    %v591 = vand.u32 %v589, 31
    %v592 = vsub.s32 32, %v591
    %v593 = vshrl.u32 683565275, %v592
    %v594 = vshll.u32 683565275, %v591
    %v595 = vshrl.u32 2475754826, %v592
    %v596 = vor.u32 %v594, %v595
    %v597 = vshll.u32 2475754826, %v591
    %v598 = vshrl.u32 2131351028, %v592
    %v599 = vor.u32 %v597, %v598
    %v600 = vshll.u32 2131351028, %v591
    %v601 = vshrl.u32 2102212464, %v592
    %v602 = vor.u32 %v600, %v601
    %v603 = vshll.u32 2102212464, %v591
    %v604 = vshrl.u32 920167782, %v592
    %v605 = vor.u32 %v603, %v604
    %v606 = vshll.u32 920167782, %v591
    %v607 = vshrl.u32 1326507024, %v592
    %v608 = vor.u32 %v606, %v607
    %vm609 = vcmp.lt.s32.totalorder %v590, 1
    %vm610 = vcmp.lt.s32.totalorder %v590, 2
    %vm611 = vcmp.lt.s32.totalorder %v590, 3
    %vm612 = vcmp.lt.s32.totalorder %v590, 4
    %v613 = vsel %vm609, %v593, %v596
    %v614 = vsel %vm612, %v602, 2102212464
    %v615 = vsel %vm611, %v599, %v614
    %v616 = vsel %vm610, %v613, %v615
    %v617 = vsel %vm609, %v596, %v599
    %v618 = vsel %vm612, %v605, 920167782
    %v619 = vsel %vm611, %v602, %v618
    %v620 = vsel %vm610, %v617, %v619
    %v621 = vsel %vm609, %v599, %v602
    %v622 = vsel %vm612, %v608, 1326507024
    %v623 = vsel %vm611, %v605, %v622
    %v624 = vsel %vm610, %v621, %v623
    %v625 = vshll.u32 %v585, 8
    %v626 = vmul.u32.u64.compose %v625, %v624
    %v627 = vextract.low.u32 %v626
    %v628 = vextract.high.u32 %v626
    %v629 = vmul.u32.u64.compose %v625, %v620
    %v630 = vextract.low.u32 %v629
    %v631 = vextract.high.u32 %v629
    %v632 = vmul.u32 %v625, %v616
    %v633 = vadd.s32 %v628, %v630
    %vm634 = vc.u32 %v628, %v630
    %v635 = vadd.s32 %v631, 1
    %v636 = vsel %vm634, %v635, %v631
    %v637 = vadd.s32 %v632, %v636
    %v638 = vadd.s32 %v637, 536870912
    %v639 = vshrl.u32 %v638, 30
    %v640 = vshll.u32 %v639, 30
    %v641 = vsub.s32 %v637, %v640
    %vm642 = vcmp.lt.s32.totalorder %v641, 0
    %v643 = vsub.s32 0, %v641
    %v644 = vsel %vm642, %v643, %v641
    %v645 = vclz %v644
    %v646 = vsub.s32 %v645, 2
    %vm647 = vcmp.gt.s32.totalorder 0, %v646
    %v648 = vsel %vm647, 0, %v646
    %v649 = vsub.s32 32, %v648
    %v650 = vshll.u32 %v641, %v648
    %v651 = vshrl.u32 %v633, %v649
    %v652 = vor.u32 %v650, %v651
    %v653 = vsub.s32 4294967266, %v648
    %v654 = vadd.s32 %v653, 127
    %v655 = vshll.u32 %v654, 23
    %v656 = vor.u32 4788187, %v655
    %v657 = vand.u32 2147483647, %v656
    %v659 = vcvt.s32.f32 %v652
    %v660 = vmul.f32 %v659, %v657
    %v661 = vxor.u32 %v660, 2147483648
    %v662 = vsel %vm579, %v661, %v660
    %v663 = vsub.s32 4, %v639
    %v664 = vsel %vm579, %v663, %v639
    %v665 = vsel %vm578, %v143, %v662
    %v666 = vsel %vm578, 0, %v664
    %v667 = vcosq.f32.pop %v665
    %v668 = vsinq.f32.pop %v665
    %vm669 = vweird.f32 %v143
    %v670 = vadd.s32 %v666, 3
    %v671 = vand.u32 %v670, 3
    %vm672 = vcmp.lt.s32.totalorder %v671, 2
    %vm673 = vcmp.eq.s32.totalorder %v671, 0
    %v674 = vxor.u32 %v668, 2147483648
    %v675 = vsel %vm673, %v667, %v674
    %vm676 = vcmp.eq.s32.totalorder %v671, 2
    %v677 = vxor.u32 %v667, 2147483648
    %v678 = vsel %vm676, %v677, %v668
    %v679 = vsel %vm672, %v675, %v678
    %v680 = vsel %vm669, nan, %v679
    %v681 = vand.u32 2147483647, %v148
    %vm682 = vcmp.le.f32.partialorder %v681, 0.7853982
    %vm683 = vcmp.lt.s32.totalorder %v148, 0
    %v684 = vand.u32 %v148, 2139095040
    %v685 = vshrl.u32 %v684, 23
    %v686 = vsub.s32 %v685, 127
    %v687 = vand.u32 2147483647, %v148
    %v688 = vand.u32 %v687, 8388607
    %v689 = vor.u32 %v688, 8388608
    %v690 = vsub.s32 0, %v689
    %v691 = vadd.s32 %v686, 1
    %vm692 = vcmp.gt.s32.totalorder %v691, 0
    %v693 = vsel %vm692, %v691, 0
    %v694 = vshrl.u32 %v693, 5
    %v695 = vand.u32 %v693, 31
    %v696 = vsub.s32 32, %v695
    %v697 = vshrl.u32 683565275, %v696
    %v698 = vshll.u32 683565275, %v695
    %v699 = vshrl.u32 2475754826, %v696
    %v700 = vor.u32 %v698, %v699
    %v701 = vshll.u32 2475754826, %v695
    %v702 = vshrl.u32 2131351028, %v696
    %v703 = vor.u32 %v701, %v702
    %v704 = vshll.u32 2131351028, %v695
    %v705 = vshrl.u32 2102212464, %v696
    %v706 = vor.u32 %v704, %v705
    %v707 = vshll.u32 2102212464, %v695
    %v708 = vshrl.u32 920167782, %v696
    %v709 = vor.u32 %v707, %v708
    %v710 = vshll.u32 920167782, %v695
    %v711 = vshrl.u32 1326507024, %v696
    %v712 = vor.u32 %v710, %v711
    %vm713 = vcmp.lt.s32.totalorder %v694, 1
    %vm714 = vcmp.lt.s32.totalorder %v694, 2
    %vm715 = vcmp.lt.s32.totalorder %v694, 3
    %vm716 = vcmp.lt.s32.totalorder %v694, 4
    %v717 = vsel %vm713, %v697, %v700
    %v718 = vsel %vm716, %v706, 2102212464
    %v719 = vsel %vm715, %v703, %v718
    %v720 = vsel %vm714, %v717, %v719
    %v721 = vsel %vm713, %v700, %v703
    %v722 = vsel %vm716, %v709, 920167782
    %v723 = vsel %vm715, %v706, %v722
    %v724 = vsel %vm714, %v721, %v723
    %v725 = vsel %vm713, %v703, %v706
    %v726 = vsel %vm716, %v712, 1326507024
    %v727 = vsel %vm715, %v709, %v726
    %v728 = vsel %vm714, %v725, %v727
    %v729 = vshll.u32 %v689, 8
    %v730 = vmul.u32.u64.compose %v729, %v728
    %v731 = vextract.low.u32 %v730
    %v732 = vextract.high.u32 %v730
    %v733 = vmul.u32.u64.compose %v729, %v724
    %v734 = vextract.low.u32 %v733
    %v735 = vextract.high.u32 %v733
    %v736 = vmul.u32 %v729, %v720
    %v737 = vadd.s32 %v732, %v734
    %vm738 = vc.u32 %v732, %v734
    %v739 = vadd.s32 %v735, 1
    %v740 = vsel %vm738, %v739, %v735
    %v741 = vadd.s32 %v736, %v740
    %v742 = vadd.s32 %v741, 536870912
    %v743 = vshrl.u32 %v742, 30
    %v744 = vshll.u32 %v743, 30
    %v745 = vsub.s32 %v741, %v744
    %vm746 = vcmp.lt.s32.totalorder %v745, 0
    %v747 = vsub.s32 0, %v745
    %v748 = vsel %vm746, %v747, %v745
    %v749 = vclz %v748
    %v750 = vsub.s32 %v749, 2
    %vm751 = vcmp.gt.s32.totalorder 0, %v750
    %v752 = vsel %vm751, 0, %v750
    %v753 = vsub.s32 32, %v752
    %v754 = vshll.u32 %v745, %v752
    %v755 = vshrl.u32 %v737, %v753
    %v756 = vor.u32 %v754, %v755
    %v757 = vsub.s32 4294967266, %v752
    %v758 = vadd.s32 %v757, 127
    %v759 = vshll.u32 %v758, 23
    %v760 = vor.u32 4788187, %v759
    %v761 = vand.u32 2147483647, %v760
    %v763 = vcvt.s32.f32 %v756
    %v764 = vmul.f32 %v763, %v761
    %v765 = vxor.u32 %v764, 2147483648
    %v766 = vsel %vm683, %v765, %v764
    %v767 = vsub.s32 4, %v743
    %v768 = vsel %vm683, %v767, %v743
    %v769 = vsel %vm682, %v148, %v766
    %v770 = vsel %vm682, 0, %v768
    %v771 = vcosq.f32.pop %v769
    %v772 = vsinq.f32.pop %v769
    %vm773 = vweird.f32 %v148
    %v774 = vadd.s32 %v770, 3
    %v775 = vand.u32 %v774, 3
    %vm776 = vcmp.lt.s32.totalorder %v775, 2
    %vm777 = vcmp.eq.s32.totalorder %v775, 0
    %v778 = vxor.u32 %v772, 2147483648
    %v779 = vsel %vm777, %v771, %v778
    %vm780 = vcmp.eq.s32.totalorder %v775, 2
    %v781 = vxor.u32 %v771, 2147483648
    %v782 = vsel %vm780, %v781, %v772
    %v783 = vsel %vm776, %v779, %v782
    %v784 = vsel %vm773, nan, %v783
    %v785 = vand.u32 2147483647, %v153
    %vm786 = vcmp.le.f32.partialorder %v785, 0.7853982
    %vm787 = vcmp.lt.s32.totalorder %v153, 0
    %v788 = vand.u32 %v153, 2139095040
    %v789 = vshrl.u32 %v788, 23
    %v790 = vsub.s32 %v789, 127
    %v791 = vand.u32 2147483647, %v153
    %v792 = vand.u32 %v791, 8388607
    %v793 = vor.u32 %v792, 8388608
    %v794 = vsub.s32 0, %v793
    %v795 = vadd.s32 %v790, 1
    %vm796 = vcmp.gt.s32.totalorder %v795, 0
    %v797 = vsel %vm796, %v795, 0
    %v798 = vshrl.u32 %v797, 5
    %v799 = vand.u32 %v797, 31
    %v800 = vsub.s32 32, %v799
    %v801 = vshrl.u32 683565275, %v800
    %v802 = vshll.u32 683565275, %v799
    %v803 = vshrl.u32 2475754826, %v800
    %v804 = vor.u32 %v802, %v803
    %v805 = vshll.u32 2475754826, %v799
    %v806 = vshrl.u32 2131351028, %v800
    %v807 = vor.u32 %v805, %v806
    %v808 = vshll.u32 2131351028, %v799
    %v809 = vshrl.u32 2102212464, %v800
    %v810 = vor.u32 %v808, %v809
    %v811 = vshll.u32 2102212464, %v799
    %v812 = vshrl.u32 920167782, %v800
    %v813 = vor.u32 %v811, %v812
    %v814 = vshll.u32 920167782, %v799
    %v815 = vshrl.u32 1326507024, %v800
    %v816 = vor.u32 %v814, %v815
    %vm817 = vcmp.lt.s32.totalorder %v798, 1
    %vm818 = vcmp.lt.s32.totalorder %v798, 2
    %vm819 = vcmp.lt.s32.totalorder %v798, 3
    %vm820 = vcmp.lt.s32.totalorder %v798, 4
    %v821 = vsel %vm817, %v801, %v804
    %v822 = vsel %vm820, %v810, 2102212464
    %v823 = vsel %vm819, %v807, %v822
    %v824 = vsel %vm818, %v821, %v823
    %v825 = vsel %vm817, %v804, %v807
    %v826 = vsel %vm820, %v813, 920167782
    %v827 = vsel %vm819, %v810, %v826
    %v828 = vsel %vm818, %v825, %v827
    %v829 = vsel %vm817, %v807, %v810
    %v830 = vsel %vm820, %v816, 1326507024
    %v831 = vsel %vm819, %v813, %v830
    %v832 = vsel %vm818, %v829, %v831
    %v833 = vshll.u32 %v793, 8
    %v834 = vmul.u32.u64.compose %v833, %v832
    %v835 = vextract.low.u32 %v834
    %v836 = vextract.high.u32 %v834
    %v837 = vmul.u32.u64.compose %v833, %v828
    %v838 = vextract.low.u32 %v837
    %v839 = vextract.high.u32 %v837
    %v840 = vmul.u32 %v833, %v824
    %v841 = vadd.s32 %v836, %v838
    %vm842 = vc.u32 %v836, %v838
    %v843 = vadd.s32 %v839, 1
    %v844 = vsel %vm842, %v843, %v839
    %v845 = vadd.s32 %v840, %v844
    %v846 = vadd.s32 %v845, 536870912
    %v847 = vshrl.u32 %v846, 30
    %v848 = vshll.u32 %v847, 30
    %v849 = vsub.s32 %v845, %v848
    %vm850 = vcmp.lt.s32.totalorder %v849, 0
    %v851 = vsub.s32 0, %v849
    %v852 = vsel %vm850, %v851, %v849
    %v853 = vclz %v852
    %v854 = vsub.s32 %v853, 2
    %vm855 = vcmp.gt.s32.totalorder 0, %v854
    %v856 = vsel %vm855, 0, %v854
    %v857 = vsub.s32 32, %v856
    %v858 = vshll.u32 %v849, %v856
    %v859 = vshrl.u32 %v841, %v857
    %v860 = vor.u32 %v858, %v859
    %v861 = vsub.s32 4294967266, %v856
    %v862 = vadd.s32 %v861, 127
    %v863 = vshll.u32 %v862, 23
    %v864 = vor.u32 4788187, %v863
    %v865 = vand.u32 2147483647, %v864
    %v867 = vcvt.s32.f32 %v860
    %v868 = vmul.f32 %v867, %v865
    %v869 = vxor.u32 %v868, 2147483648
    %v870 = vsel %vm787, %v869, %v868
    %v871 = vsub.s32 4, %v847
    %v872 = vsel %vm787, %v871, %v847
    %v873 = vsel %vm786, %v153, %v870
    %v874 = vsel %vm786, 0, %v872
    %v875 = vcosq.f32.pop %v873
    %v876 = vsinq.f32.pop %v873
    %vm877 = vweird.f32 %v153
    %v878 = vadd.s32 %v874, 3
    %v879 = vand.u32 %v878, 3
    %vm880 = vcmp.lt.s32.totalorder %v879, 2
    %vm881 = vcmp.eq.s32.totalorder %v879, 0
    %v882 = vxor.u32 %v876, 2147483648
    %v883 = vsel %vm881, %v875, %v882
    %vm884 = vcmp.eq.s32.totalorder %v879, 2
    %v885 = vxor.u32 %v875, 2147483648
    %v886 = vsel %vm884, %v885, %v876
    %v887 = vsel %vm880, %v883, %v886
    %v888 = vsel %vm877, nan, %v887
    %v889 = vand.u32 2147483647, %v158
    %vm890 = vcmp.le.f32.partialorder %v889, 0.7853982
    %vm891 = vcmp.lt.s32.totalorder %v158, 0
    %v892 = vand.u32 %v158, 2139095040
    %v893 = vshrl.u32 %v892, 23
    %v894 = vsub.s32 %v893, 127
    %v895 = vand.u32 2147483647, %v158
    %v896 = vand.u32 %v895, 8388607
    %v897 = vor.u32 %v896, 8388608
    %v898 = vsub.s32 0, %v897
    %v899 = vadd.s32 %v894, 1
    %vm900 = vcmp.gt.s32.totalorder %v899, 0
    %v901 = vsel %vm900, %v899, 0
    %v902 = vshrl.u32 %v901, 5
    %v903 = vand.u32 %v901, 31
    %v904 = vsub.s32 32, %v903
    %v905 = vshrl.u32 683565275, %v904
    %v906 = vshll.u32 683565275, %v903
    %v907 = vshrl.u32 2475754826, %v904
    %v908 = vor.u32 %v906, %v907
    %v909 = vshll.u32 2475754826, %v903
    %v910 = vshrl.u32 2131351028, %v904
    %v911 = vor.u32 %v909, %v910
    %v912 = vshll.u32 2131351028, %v903
    %v913 = vshrl.u32 2102212464, %v904
    %v914 = vor.u32 %v912, %v913
    %v915 = vshll.u32 2102212464, %v903
    %v916 = vshrl.u32 920167782, %v904
    %v917 = vor.u32 %v915, %v916
    %v918 = vshll.u32 920167782, %v903
    %v919 = vshrl.u32 1326507024, %v904
    %v920 = vor.u32 %v918, %v919
    %vm921 = vcmp.lt.s32.totalorder %v902, 1
    %vm922 = vcmp.lt.s32.totalorder %v902, 2
    %vm923 = vcmp.lt.s32.totalorder %v902, 3
    %vm924 = vcmp.lt.s32.totalorder %v902, 4
    %v925 = vsel %vm921, %v905, %v908
    %v926 = vsel %vm924, %v914, 2102212464
    %v927 = vsel %vm923, %v911, %v926
    %v928 = vsel %vm922, %v925, %v927
    %v929 = vsel %vm921, %v908, %v911
    %v930 = vsel %vm924, %v917, 920167782
    %v931 = vsel %vm923, %v914, %v930
    %v932 = vsel %vm922, %v929, %v931
    %v933 = vsel %vm921, %v911, %v914
    %v934 = vsel %vm924, %v920, 1326507024
    %v935 = vsel %vm923, %v917, %v934
    %v936 = vsel %vm922, %v933, %v935
    %v937 = vshll.u32 %v897, 8
    %v938 = vmul.u32.u64.compose %v937, %v936
    %v939 = vextract.low.u32 %v938
    %v940 = vextract.high.u32 %v938
    %v941 = vmul.u32.u64.compose %v937, %v932
    %v942 = vextract.low.u32 %v941
    %v943 = vextract.high.u32 %v941
    %v944 = vmul.u32 %v937, %v928
    %v945 = vadd.s32 %v940, %v942
    %vm946 = vc.u32 %v940, %v942
    %v947 = vadd.s32 %v943, 1
    %v948 = vsel %vm946, %v947, %v943
    %v949 = vadd.s32 %v944, %v948
    %v950 = vadd.s32 %v949, 536870912
    %v951 = vshrl.u32 %v950, 30
    %v952 = vshll.u32 %v951, 30
    %v953 = vsub.s32 %v949, %v952
    %vm954 = vcmp.lt.s32.totalorder %v953, 0
    %v955 = vsub.s32 0, %v953
    %v956 = vsel %vm954, %v955, %v953
    %v957 = vclz %v956
    %v958 = vsub.s32 %v957, 2
    %vm959 = vcmp.gt.s32.totalorder 0, %v958
    %v960 = vsel %vm959, 0, %v958
    %v961 = vsub.s32 32, %v960
    %v962 = vshll.u32 %v953, %v960
    %v963 = vshrl.u32 %v945, %v961
    %v964 = vor.u32 %v962, %v963
    %v965 = vsub.s32 4294967266, %v960
    %v966 = vadd.s32 %v965, 127
    %v967 = vshll.u32 %v966, 23
    %v968 = vor.u32 4788187, %v967
    %v969 = vand.u32 2147483647, %v968
    %v971 = vcvt.s32.f32 %v964
    %v972 = vmul.f32 %v971, %v969
    %v973 = vxor.u32 %v972, 2147483648
    %v974 = vsel %vm891, %v973, %v972
    %v975 = vsub.s32 4, %v951
    %v976 = vsel %vm891, %v975, %v951
    %v977 = vsel %vm890, %v158, %v974
    %v978 = vsel %vm890, 0, %v976
    %v979 = vcosq.f32.pop %v977
    %v980 = vsinq.f32.pop %v977
    %vm981 = vweird.f32 %v158
    %v982 = vadd.s32 %v978, 3
    %v983 = vand.u32 %v982, 3
    %vm984 = vcmp.lt.s32.totalorder %v983, 2
    %vm985 = vcmp.eq.s32.totalorder %v983, 0
    %v986 = vxor.u32 %v980, 2147483648
    %v987 = vsel %vm985, %v979, %v986
    %vm988 = vcmp.eq.s32.totalorder %v983, 2
    %v989 = vxor.u32 %v979, 2147483648
    %v990 = vsel %vm988, %v989, %v980
    %v991 = vsel %vm984, %v987, %v990
    %v992 = vsel %vm981, nan, %v991
    %993 = vst [vmem:[#allocation2] sm:$0xff] %v264
    %994 = vst [vmem:[#allocation2 + $0x8] sm:$0xff] %v368
    %995 = vst [vmem:[#allocation2 + $0x10] sm:$0xff] %v472
    %996 = vst [vmem:[#allocation2 + $0x18] sm:$0xff] %v576
    %997 = vst [vmem:[#allocation2 + $0x20] sm:$0xff] %v680
    %998 = vst [vmem:[#allocation2 + $0x28] sm:$0xff] %v784
    %999 = vst [vmem:[#allocation2 + $0x30] sm:$0xff] %v888
    %1000 = vst [vmem:[#allocation2 + $0x38] sm:$0xff] %v992
    // Predicated region
    $region14: #{tpu_custom_call.1} parent=1 // pred_check
      _
    $region15: #{tpu_custom_call.1} parent=1 // pred_check_branch
      %1002 = sbr.rel (0) target = $region17
    $region16: #{tpu_custom_call.1} parent=1 // pred_region
      %s1004 = ssub.s32 1024, 1024
      %1005 = vsyncadd [#allocation3], %s1004
      %s1006 = sshll.u32 [#allocation2], 4
      %s1007 = int_to_ptr.vmem [resolvable:$true] %s1006
      %1012 = dma.vmem_to_hbm [thread:$0]  %s1007, 1024, %s3, [#allocation3], 128, 128, 8
    $region17: #{tpu_custom_call.1} parent=1 // pred_fallthru
      _
    // Predicated region
    $region18: #{tpu_custom_call.1} parent=1 // pred_check
      _
    $region19: #{tpu_custom_call.1} parent=1 // pred_check_branch
      %1014 = sbr.rel (0) target = $region21
    $region20: #{tpu_custom_call.1} parent=1 // pred_region
      %1015 = dma.done [#allocation3], 1024
    $region21: #{tpu_custom_call.1} parent=1 // pred_fallthru
      _
    %1016 = vsyncpa [#allocation3], 1

</llo_original>
